<compile_context>
chip_gen: v5e
topology: v5e:2x2
jax: 0.10.0
libtpu: 0.0.40
codegen_flags: <defaults>
</compile_context>

<pallas_src>
import functools
import math

import jax
import jax.numpy as jnp
from jax.experimental import pallas as pl
from jax.experimental.pallas import tpu as pltpu


def _round_up(x, m):
    return ((x + m - 1) // m) * m


def _cdiv(a, b):
    return (a + b - 1) // b


def _tensorcores_per_chip():
    """2 for megacore / dual-TC chips (v4, v5p, v7x); 1 for v5e/v6e-style chips."""
    try:
        kind = jax.devices()[0].device_kind.lower().replace(" ", "")
    except Exception:
        return 1
    if "lite" in kind or "v5e" in kind or "v6e" in kind:
        return 1
    if "v4" in kind or "v5" in kind or "v7" in kind:
        return 2
    return 1


def _pick_tb(B, mult, n_cores, cap=2048):
    """Batch tile policy.

    Single-TC chips: the grid is a serial loop with ~0.35us/step overhead and this
    MLP is HBM/step-overhead bound, so use the fewest steps possible (tb up to cap).
    Dual-TC chips: use >= n_cores balanced steps so both cores get work.
    VMEM is a non-issue at these sizes on every generation (incl. v7x's 64 MiB).
    """
    if n_cores <= 1:
        return max(mult, min(_round_up(B, mult), cap))
    steps = n_cores
    while _cdiv(B, steps) > cap:
        steps += n_cores
    return max(mult, _round_up(_cdiv(B, steps), mult))


def _id_predictor_kernel(x_ref, w1_ref, b1_ref, w2_ref, b2_ref, w3_ref, b3_ref, o_ref):
    cdt = w1_ref.dtype            # MXU input dtype (bf16 or f32); accumulation is f32
    x = x_ref[...].astype(cdt)    # in-kernel cast: feat ships over HBM un-padded/un-cast
    # Layer 1: (tb, nz) @ (nz, 256) -> f32 acc, +bias, ReLU (f32 on VPU)
    h = jnp.dot(x, w1_ref[...], preferred_element_type=jnp.float32)
    h = jnp.maximum(h + b1_ref[...], 0.0)
    # Layer 2: (tb, 256) @ (256, 128)
    h = jnp.dot(h.astype(cdt), w2_ref[...], preferred_element_type=jnp.float32)
    h = jnp.maximum(h + b2_ref[...], 0.0)
    # Layer 3: (tb, 128) @ (128, 64)  (no lane padding; 64 == full output last dim)
    h = jnp.dot(h.astype(cdt), w3_ref[...], preferred_element_type=jnp.float32)
    o_ref[...] = (h + b3_ref[...]).astype(o_ref.dtype)


def id_predictor_forward(feat, params, *, compute_dtype=jnp.bfloat16, tb=None):
    """feat: (B, nz_feat). params: weights stored as (in, out), biases as (1, out)."""
    B, nz = feat.shape
    # Match nn.Linear: f32 params -> f32 output even for lower-precision inputs.
    out_dtype = jnp.promote_types(feat.dtype, params["w1"].dtype)

    n_cores = _tensorcores_per_chip()
    is_bf16 = jnp.dtype(compute_dtype) == jnp.dtype(jnp.bfloat16)
    mult = 16 if (is_bf16 and B >= 16) else 8   # bf16 packs 2 rows/sublane
    if tb is None:
        tb = _pick_tb(B, mult, n_cores)
    else:
        tb = max(mult, _round_up(int(tb), mult))

    # Weights/biases: cast only, no padding. Call this wrapper under jit (or pre-cast
    # params once) so these casts constant-fold instead of re-running per call.
    w1 = params["w1"].astype(compute_dtype)   # (nz, 256)
    w2 = params["w2"].astype(compute_dtype)   # (256, 128)
    w3 = params["w3"].astype(compute_dtype)   # (128, 64)
    b1 = params["b1"].astype(jnp.float32)     # (1, 256)
    b2 = params["b2"].astype(jnp.float32)     # (1, 128)
    b3 = params["b3"].astype(jnp.float32)     # (1, 64)

    grid = (_cdiv(B, tb),)

    w_itm = jnp.dtype(compute_dtype).itemsize
    cost = pl.CostEstimate(
        flops=2 * B * (nz * 256 + 256 * 128 + 128 * 64),
        transcendentals=0,
        bytes_accessed=(B * nz * feat.dtype.itemsize
                        + B * 64 * jnp.dtype(out_dtype).itemsize
                        + (nz * 256 + 256 * 128 + 128 * 64) * w_itm
                        + (256 + 128 + 64) * 4))

    return pl.pallas_call(
        _id_predictor_kernel,
        out_shape=jax.ShapeDtypeStruct((B, 64), out_dtype),
        grid_spec=pltpu.PrefetchScalarGridSpec(
            num_scalar_prefetch=0,
            grid=grid,
            in_specs=[
                pl.BlockSpec((tb, nz), lambda i: (i, 0)),     # feat (batch-tiled, no pad)
                pl.BlockSpec((nz, 256), lambda i: (0, 0)),    # w1 (VMEM-resident)
                pl.BlockSpec((1, 256), lambda i: (0, 0)),     # b1
                pl.BlockSpec((256, 128), lambda i: (0, 0)),   # w2
                pl.BlockSpec((1, 128), lambda i: (0, 0)),     # b2
                pl.BlockSpec((128, 64), lambda i: (0, 0)),    # w3 (no lane pad)
                pl.BlockSpec((1, 64), lambda i: (0, 0)),      # b3
            ],
            out_specs=pl.BlockSpec((tb, 64), lambda i: (i, 0)),
        ),
        compiler_params=pltpu.CompilerParams(
            dimension_semantics=("parallel",)),
        cost_estimate=cost,
    )(feat, w1, b1, w2, b2, w3, b3)


def init_params(nz_feat, key):
    """nn.Linear default init U(-1/sqrt(in), 1/sqrt(in)); weights stored as (in, out)."""
    keys = jax.random.split(key, 6)
    dims = [(nz_feat, 256), (256, 128), (128, 64)]
    params = {}
    for idx, (fan_in, fan_out) in enumerate(dims, start=1):
        bound = 1.0 / math.sqrt(fan_in)
        w = jax.random.uniform(keys[2 * (idx - 1)], (fan_in, fan_out),
                               minval=-bound, maxval=bound, dtype=jnp.float32)
        b = jax.random.uniform(keys[2 * (idx - 1) + 1], (1, fan_out),
                               minval=-bound, maxval=bound, dtype=jnp.float32)
        params[f"w{idx}"] = w
        params[f"b{idx}"] = b
    return params


def reference_forward(feat, params):
    h = jnp.maximum(feat @ params["w1"] + params["b1"], 0.0)
    h = jnp.maximum(h @ params["w2"] + params["b2"], 0.0)
    return h @ params["w3"] + params["b3"]


if __name__ == "__main__":
    key = jax.random.PRNGKey(0)
    k_feat, k_params = jax.random.split(key)

    B, nz_feat = 8, 32
    feat = jax.random.normal(k_feat, (B, nz_feat), dtype=jnp.float32)
    params = init_params(nz_feat, k_params)
    ref = reference_forward(feat, params)

    # Exact f32 path: matches nn.Linear semantics.
    fwd_f32 = jax.jit(functools.partial(id_predictor_forward, compute_dtype=jnp.float32))
    out_f32 = jax.block_until_ready(fwd_f32(feat, params))
    assert out_f32.shape == (B, 64), out_f32.shape
    assert out_f32.dtype == jnp.float32, out_f32.dtype
    assert jnp.allclose(out_f32, ref, atol=1e-5, rtol=1e-5), "f32 kernel mismatch"

    # Fast bf16-MXU path (f32 accumulation): looser tolerance per bf16 mantissa.
    fwd_bf16 = jax.jit(functools.partial(id_predictor_forward, compute_dtype=jnp.bfloat16))
    out_bf16 = jax.block_until_ready(fwd_bf16(feat, params))
    assert out_bf16.shape == (B, 64), out_bf16.shape
    assert jnp.allclose(out_bf16, ref, atol=3e-2, rtol=3e-2), "bf16 kernel mismatch"

    # Ragged batch: B not a multiple of the tile -> exercises the clamped edge block
    # (no wrapper-side batch padding / post-slice copies anymore).
    B2 = 24
    feat2 = jax.random.normal(jax.random.PRNGKey(1), (B2, nz_feat), dtype=jnp.float32)
    ref2 = reference_forward(feat2, params)
    out2 = jax.block_until_ready(fwd_bf16(feat2, params))
    assert out2.shape == (B2, 64), out2.shape
    assert jnp.allclose(out2, ref2, atol=3e-2, rtol=3e-2), "ragged-batch mismatch"

    print("KERNEL_OK")
</pallas_src>

<mosaic_0001>
module attributes {stable_mosaic.version = 11 : i64} {
  func.func @_id_predictor_kernel(%arg0: i32, %arg1: memref<8x32xf32, #tpu.memory_space<vmem>>, %arg2: memref<32x256xf32, #tpu.memory_space<vmem>>, %arg3: memref<1x256xf32, #tpu.memory_space<vmem>>, %arg4: memref<256x128xf32, #tpu.memory_space<vmem>>, %arg5: memref<1x128xf32, #tpu.memory_space<vmem>>, %arg6: memref<128x64xf32, #tpu.memory_space<vmem>>, %arg7: memref<1x64xf32, #tpu.memory_space<vmem>>, %arg8: memref<8x64xf32, #tpu.memory_space<vmem>>) attributes {dimension_semantics = [#tpu.dimension_semantics<parallel>], iteration_bounds = array<i64: 1>, scalar_prefetch = 0 : i64, scratch_operands = 0 : i64, tpu.core_type = #tpu.core_type<tc>, window_params = [{transform_indices = @transform_0, window_bounds = array<i64: 8, 32>}, {pipeline_mode = #tpu.pipeline_mode<synchronous>, transform_indices = @transform_1, window_bounds = array<i64: 32, 256>}, {pipeline_mode = #tpu.pipeline_mode<synchronous>, transform_indices = @transform_2, window_bounds = array<i64: 1, 256>}, {pipeline_mode = #tpu.pipeline_mode<synchronous>, transform_indices = @transform_3, window_bounds = array<i64: 256, 128>}, {pipeline_mode = #tpu.pipeline_mode<synchronous>, transform_indices = @transform_4, window_bounds = array<i64: 1, 128>}, {pipeline_mode = #tpu.pipeline_mode<synchronous>, transform_indices = @transform_5, window_bounds = array<i64: 128, 64>}, {pipeline_mode = #tpu.pipeline_mode<synchronous>, transform_indices = @transform_6, window_bounds = array<i64: 1, 64>}, {transform_indices = @transform_7, window_bounds = array<i64: 8, 64>}]} {
    %c0 = arith.constant 0 : index
    %c0_0 = arith.constant 0 : index
    %0 = vector.load %arg1[%c0, %c0_0] : memref<8x32xf32, #tpu.memory_space<vmem>>, vector<8x32xf32>
    %c0_1 = arith.constant 0 : index
    %c0_2 = arith.constant 0 : index
    %1 = vector.load %arg2[%c0_1, %c0_2] : memref<32x256xf32, #tpu.memory_space<vmem>>, vector<32x256xf32>
    %cst = arith.constant dense<0.000000e+00> : vector<8x256xf32>
    %2 = tpu.matmul %0, %1, %cst {dimension_numbers = #tpu.dot_dimension_numbers<[1], [0], [0], [1], [0, 0, 1, 1], [], []>} : vector<8x32xf32>, vector<32x256xf32>, vector<8x256xf32> -> vector<8x256xf32>
    %c0_3 = arith.constant 0 : index
    %c0_4 = arith.constant 0 : index
    %3 = vector.load %arg3[%c0_3, %c0_4] : memref<1x256xf32, #tpu.memory_space<vmem>>, vector<1x256xf32>
    %4 = vector.broadcast %3 : vector<1x256xf32> to vector<8x256xf32>
    %5 = arith.addf %2, %4 : vector<8x256xf32>
    %cst_5 = arith.constant 0.000000e+00 : f32
    %6 = vector.broadcast %cst_5 : f32 to vector<8x256xf32>
    %7 = arith.maximumf %5, %6 : vector<8x256xf32>
    %c0_6 = arith.constant 0 : index
    %c0_7 = arith.constant 0 : index
    %8 = vector.load %arg4[%c0_6, %c0_7] : memref<256x128xf32, #tpu.memory_space<vmem>>, vector<256x128xf32>
    %cst_8 = arith.constant dense<0.000000e+00> : vector<8x128xf32>
    %9 = tpu.matmul %7, %8, %cst_8 {dimension_numbers = #tpu.dot_dimension_numbers<[1], [0], [0], [1], [0, 0, 1, 1], [], []>} : vector<8x256xf32>, vector<256x128xf32>, vector<8x128xf32> -> vector<8x128xf32>
    %c0_9 = arith.constant 0 : index
    %c0_10 = arith.constant 0 : index
    %10 = vector.load %arg5[%c0_9, %c0_10] : memref<1x128xf32, #tpu.memory_space<vmem>>, vector<1x128xf32>
    %11 = vector.broadcast %10 : vector<1x128xf32> to vector<8x128xf32>
    %12 = arith.addf %9, %11 : vector<8x128xf32>
    %cst_11 = arith.constant 0.000000e+00 : f32
    %13 = vector.broadcast %cst_11 : f32 to vector<8x128xf32>
    %14 = arith.maximumf %12, %13 : vector<8x128xf32>
    %c0_12 = arith.constant 0 : index
    %c0_13 = arith.constant 0 : index
    %15 = vector.load %arg6[%c0_12, %c0_13] : memref<128x64xf32, #tpu.memory_space<vmem>>, vector<128x64xf32>
    %cst_14 = arith.constant dense<0.000000e+00> : vector<8x64xf32>
    %16 = tpu.matmul %14, %15, %cst_14 {dimension_numbers = #tpu.dot_dimension_numbers<[1], [0], [0], [1], [0, 0, 1, 1], [], []>} : vector<8x128xf32>, vector<128x64xf32>, vector<8x64xf32> -> vector<8x64xf32>
    %c0_15 = arith.constant 0 : index
    %c0_16 = arith.constant 0 : index
    %17 = vector.load %arg7[%c0_15, %c0_16] : memref<1x64xf32, #tpu.memory_space<vmem>>, vector<1x64xf32>
    %18 = vector.broadcast %17 : vector<1x64xf32> to vector<8x64xf32>
    %19 = arith.addf %16, %18 : vector<8x64xf32>
    %c0_17 = arith.constant 0 : index
    %c0_18 = arith.constant 0 : index
    %20 = vector.load %arg8[%c0_17, %c0_18] : memref<8x64xf32, #tpu.memory_space<vmem>>, vector<8x64xf32>
    tpu.vector_store %arg8[%c0_17, %c0_18], %19 {strides = array<i32>} : memref<8x64xf32, #tpu.memory_space<vmem>>, vector<8x64xf32>,
    return
  }
  func.func @transform_0(%arg0: i32) -> (i32, i32) {
    %c0_i32 = arith.constant 0 : i32
    %c0_i32_0 = arith.constant 0 : i32
    return %arg0, %c0_i32 : i32, i32
  }
  func.func @transform_1(%arg0: i32) -> (i32, i32) {
    %c0_i32 = arith.constant 0 : i32
    %c0_i32_0 = arith.constant 0 : i32
    %c0_i32_1 = arith.constant 0 : i32
    return %c0_i32, %c0_i32_0 : i32, i32
  }
  func.func @transform_2(%arg0: i32) -> (i32, i32) {
    %c0_i32 = arith.constant 0 : i32
    %c0_i32_0 = arith.constant 0 : i32
    %c0_i32_1 = arith.constant 0 : i32
    return %c0_i32, %c0_i32_0 : i32, i32
  }
  func.func @transform_3(%arg0: i32) -> (i32, i32) {
    %c0_i32 = arith.constant 0 : i32
    %c0_i32_0 = arith.constant 0 : i32
    %c0_i32_1 = arith.constant 0 : i32
    return %c0_i32, %c0_i32_0 : i32, i32
  }
  func.func @transform_4(%arg0: i32) -> (i32, i32) {
    %c0_i32 = arith.constant 0 : i32
    %c0_i32_0 = arith.constant 0 : i32
    %c0_i32_1 = arith.constant 0 : i32
    return %c0_i32, %c0_i32_0 : i32, i32
  }
  func.func @transform_5(%arg0: i32) -> (i32, i32) {
    %c0_i32 = arith.constant 0 : i32
    %c0_i32_0 = arith.constant 0 : i32
    %c0_i32_1 = arith.constant 0 : i32
    return %c0_i32, %c0_i32_0 : i32, i32
  }
  func.func @transform_6(%arg0: i32) -> (i32, i32) {
    %c0_i32 = arith.constant 0 : i32
    %c0_i32_0 = arith.constant 0 : i32
    %c0_i32_1 = arith.constant 0 : i32
    return %c0_i32, %c0_i32_0 : i32, i32
  }
  func.func @transform_7(%arg0: i32) -> (i32, i32) {
    %c0_i32 = arith.constant 0 : i32
    %c0_i32_0 = arith.constant 0 : i32
    return %arg0, %c0_i32 : i32, i32
  }
}

</mosaic_0001>

<llo_original>
// kernel: id_predictor_forward.1
$region0: #{id_predictor_forward.1}
  #allocation0 [shape = 'u32[]', space=smem, size = 0x4, offset = 0x4, fixed_abs, tag = 'smem constant byte address 0x4 - core index']
  #allocation1 [shape = 'u32[72,128]{1,0:T(1,128)}', space=vmem, size = 0x9000, scoped, tag = 'internal scratch']
  %s0 = inlined_call_operand.vmem [shape: f32[8,32], index: 0, kind: input, shape index: {}]
  %s1 = inlined_call_operand.vmem [shape: f32[32,256], index: 1, kind: input, shape index: {}]
  %s2 = inlined_call_operand.vmem [shape: f32[1,256], index: 2, kind: input, shape index: {}]
  %s3 = inlined_call_operand.hbm [shape: f32[256,128], index: 3, kind: input, shape index: {}]
  %s4 = inlined_call_operand.vmem [shape: f32[1,128], index: 4, kind: input, shape index: {}]
  %s5 = inlined_call_operand.vmem [shape: f32[128,64], index: 5, kind: input, shape index: {}]
  %s6 = inlined_call_operand.vmem [shape: f32[1,64], index: 6, kind: input, shape index: {}]
  %s7 = inlined_call_operand.hbm [shape: f32[8,64], index: 7, kind: output, shape index: {}]
  %s8 = sld [smem:[#allocation0]]
  $region42: #{id_predictor_forward.1} parent=0
    _
  %s10 = ssub.s32 1, %s8
  %s11 = scalar_select 0, %s10, %s8
  $region1: #{id_predictor_forward.1} parent=0
    #allocation2 [shape = 'u8[131072]{0}', space=vmem, size = 0x20000, scoped, tag = 'input window, operand 3, single buffered']
    #allocation3 [shape = 's32[1]{0}', space=sflag, size = 0x4, scoped, tag = 'scoped memory for id_predictor_forward.1']
    #allocation4 [shape = 's32[1]{0}', space=sflag, size = 0x4, scoped, tag = 'scoped memory for id_predictor_forward.1']
    #allocation5 [shape = 'u8[4096]{0}', space=vmem, size = 0x1000, scoped, tag = 'output window, operand 0, single buffered']
    %12 = vsyncpa [#allocation3], 0
    %13 = vsyncpa [#allocation4], 0
    // Predicated region
    $region2: #{id_predictor_forward.1} parent=1 // pred_check
      _
    $region3: #{id_predictor_forward.1} parent=1 // pred_check_branch
      %15 = sbr.rel (0) target = $region5
    $region4: #{id_predictor_forward.1} parent=1 // pred_region
      _
    $region5: #{id_predictor_forward.1} parent=1 // pred_fallthru
      _
    // Predicated region
    $region6: #{id_predictor_forward.1} parent=1 // pred_check
      _
    $region7: #{id_predictor_forward.1} parent=1 // pred_check_branch
      %17 = sbr.rel (0) target = $region9
    $region8: #{id_predictor_forward.1} parent=1 // pred_region
      _
    $region9: #{id_predictor_forward.1} parent=1 // pred_fallthru
      _
    // Predicated region
    $region10: #{id_predictor_forward.1} parent=1 // pred_check
      _
    $region11: #{id_predictor_forward.1} parent=1 // pred_check_branch
      %19 = sbr.rel (0) target = $region13
    $region12: #{id_predictor_forward.1} parent=1 // pred_region
      _
    $region13: #{id_predictor_forward.1} parent=1 // pred_fallthru
      _
    // Predicated region
    $region14: #{id_predictor_forward.1} parent=1 // pred_check
      _
    $region15: #{id_predictor_forward.1} parent=1 // pred_check_branch
      %21 = sbr.rel (0) target = $region17
    $region16: #{id_predictor_forward.1} parent=1 // pred_region
      %23 = vsyncadd [#allocation3], 0
      %s24 = sshll.u32 %s3, 4
      %s25 = int_to_ptr.hbm [resolvable:$true] %s24
      %s26 = sshll.u32 [#allocation2], 4
      %s27 = int_to_ptr.vmem [resolvable:$true] %s26
      %32 = dma.hbm_to_vmem [thread:$0]  %s25, 4096, %s27, [#allocation3], 128, 128, 8
    $region17: #{id_predictor_forward.1} parent=1 // pred_fallthru
      _
    // Predicated region
    $region18: #{id_predictor_forward.1} parent=1 // pred_check
      _
    $region19: #{id_predictor_forward.1} parent=1 // pred_check_branch
      %34 = sbr.rel (0) target = $region21
    $region20: #{id_predictor_forward.1} parent=1 // pred_region
      _
    $region21: #{id_predictor_forward.1} parent=1 // pred_fallthru
      _
    // Predicated region
    $region22: #{id_predictor_forward.1} parent=1 // pred_check
      _
    $region23: #{id_predictor_forward.1} parent=1 // pred_check_branch
      %36 = sbr.rel (0) target = $region25
    $region24: #{id_predictor_forward.1} parent=1 // pred_region
      _
    $region25: #{id_predictor_forward.1} parent=1 // pred_fallthru
      _
    // Predicated region
    $region26: #{id_predictor_forward.1} parent=1 // pred_check
      _
    $region27: #{id_predictor_forward.1} parent=1 // pred_check_branch
      %38 = sbr.rel (0) target = $region29
    $region28: #{id_predictor_forward.1} parent=1 // pred_region
      _
    $region29: #{id_predictor_forward.1} parent=1 // pred_fallthru
      _
    // Predicated region
    $region30: #{id_predictor_forward.1} parent=1 // pred_check
      _
    $region31: #{id_predictor_forward.1} parent=1 // pred_check_branch
      %40 = sbr.rel (0) target = $region33
    $region32: #{id_predictor_forward.1} parent=1 // pred_region
      %42 = dma.done [#allocation3], 4096
    $region33: #{id_predictor_forward.1} parent=1 // pred_fallthru
      _
    %v43 = vld [vmem:[%s0] sm:$0xff]
    %v44 = vld [vmem:[%s1] sm:$0xff]
    %v45 = vld [vmem:[%s1 + $0x8] sm:$0xff]
    %v46 = vld [vmem:[%s1 + $0x10] sm:$0xff]
    %v47 = vld [vmem:[%s1 + $0x18] sm:$0xff]
    %v48 = vld [vmem:[%s1 + $0x20] sm:$0xff]
    %v49 = vld [vmem:[%s1 + $0x28] sm:$0xff]
    %v50 = vld [vmem:[%s1 + $0x30] sm:$0xff]
    %v51 = vld [vmem:[%s1 + $0x38] sm:$0xff]
    %v52 = vld [vmem:[%s2] sm:$0x3]
    %v54 = vperm.slane %v52, 0
    %v55 = vperm.slane %v52, 1
    %vm58 = vcmask 261120
    %v60 = vsel %vm58, %v43, 0
    %62 = vmatpush.msra.mxu0 0.0
    %63 = vmatpush.msra.mxu0 0.0
    %64 = vmatpush.msra.mxu0 0.0
    %65 = vmatpush.msra.mxu0 0.0
    %66 = vmatpush.msra.mxu0 0.0
    %67 = vmatpush.msra.mxu0 0.0
    %68 = vmatpush.msra.mxu0 0.0
    %69 = vmatpush.msra.mxu0 0.0
    %70 = vmatpush.msra.mxu0 0.0
    %71 = vmatpush.msra.mxu0 0.0
    %72 = vmatpush.msra.mxu0 0.0
    %73 = vmatpush.msra.mxu0 0.0
    %74 = vmatpush.msra.mxu0 %v50
    %75 = vmatpush.msra.mxu0 %v48
    %76 = vmatpush.msra.mxu0 %v46
    %77 = vmatpush.msra.mxu0 %v44
    %78 = vmatmul.f32.gmra.mxu0 %v60
    %v79 = vpop.f32.mrf.mxu0
    %v80 = vadd.f32 %v54, %v79
    %81 = vdwg.mxu0
    %82 = vmatpush.msra.mxu0 0.0
    %83 = vmatpush.msra.mxu0 0.0
    %84 = vmatpush.msra.mxu0 0.0
    %85 = vmatpush.msra.mxu0 0.0
    %86 = vmatpush.msra.mxu0 0.0
    %87 = vmatpush.msra.mxu0 0.0
    %88 = vmatpush.msra.mxu0 0.0
    %89 = vmatpush.msra.mxu0 0.0
    %90 = vmatpush.msra.mxu0 0.0
    %91 = vmatpush.msra.mxu0 0.0
    %92 = vmatpush.msra.mxu0 0.0
    %93 = vmatpush.msra.mxu0 0.0
    %94 = vmatpush.msra.mxu0 %v51
    %95 = vmatpush.msra.mxu0 %v49
    %96 = vmatpush.msra.mxu0 %v47
    %97 = vmatpush.msra.mxu0 %v45
    %98 = vmatmul.f32.gmra.mxu0 %v60
    %v99 = vpop.f32.mrf.mxu0
    %v100 = vadd.f32 %v55, %v99
    %101 = vdwg.mxu0
    %v102 = vmax.f32 %v80, 0.0
    %v103 = vmax.f32 %v100, 0.0
    %v104 = vld [vmem:[#allocation2] sm:$0xff]
    %v105 = vld [vmem:[#allocation2 + $0x8] sm:$0xff]
    %v106 = vld [vmem:[#allocation2 + $0x10] sm:$0xff]
    %v107 = vld [vmem:[#allocation2 + $0x18] sm:$0xff]
    %v108 = vld [vmem:[#allocation2 + $0x20] sm:$0xff]
    %v109 = vld [vmem:[#allocation2 + $0x28] sm:$0xff]
    %v110 = vld [vmem:[#allocation2 + $0x30] sm:$0xff]
    %v111 = vld [vmem:[#allocation2 + $0x38] sm:$0xff]
    %v112 = vld [vmem:[#allocation2 + $0x40] sm:$0xff]
    %v113 = vld [vmem:[#allocation2 + $0x48] sm:$0xff]
    %v114 = vld [vmem:[#allocation2 + $0x50] sm:$0xff]
    %v115 = vld [vmem:[#allocation2 + $0x58] sm:$0xff]
    %v116 = vld [vmem:[#allocation2 + $0x60] sm:$0xff]
    %v117 = vld [vmem:[#allocation2 + $0x68] sm:$0xff]
    %v118 = vld [vmem:[#allocation2 + $0x70] sm:$0xff]
    %v119 = vld [vmem:[#allocation2 + $0x78] sm:$0xff]
    %v120 = vld [vmem:[#allocation2 + $0x80] sm:$0xff]
    %v121 = vld [vmem:[#allocation2 + $0x88] sm:$0xff]
    %v122 = vld [vmem:[#allocation2 + $0x90] sm:$0xff]
    %v123 = vld [vmem:[#allocation2 + $0x98] sm:$0xff]
    %v124 = vld [vmem:[#allocation2 + $0xa0] sm:$0xff]
    %v125 = vld [vmem:[#allocation2 + $0xa8] sm:$0xff]
    %v126 = vld [vmem:[#allocation2 + $0xb0] sm:$0xff]
    %v127 = vld [vmem:[#allocation2 + $0xb8] sm:$0xff]
    %v128 = vld [vmem:[#allocation2 + $0xc0] sm:$0xff]
    %v129 = vld [vmem:[#allocation2 + $0xc8] sm:$0xff]
    %v130 = vld [vmem:[#allocation2 + $0xd0] sm:$0xff]
    %v131 = vld [vmem:[#allocation2 + $0xd8] sm:$0xff]
    %v132 = vld [vmem:[#allocation2 + $0xe0] sm:$0xff]
    %v133 = vld [vmem:[#allocation2 + $0xe8] sm:$0xff]
    %v134 = vld [vmem:[#allocation2 + $0xf0] sm:$0xff]
    %v135 = vld [vmem:[#allocation2 + $0xf8] sm:$0xff]
    %v136 = vld [vmem:[%s4] sm:$0x1]
    %v138 = vperm.slane %v136, 0
    %140 = vmatpush.msra.mxu0 %v119
    %141 = vmatpush.msra.mxu0 %v118
    %142 = vmatpush.msra.mxu0 %v117
    %143 = vmatpush.msra.mxu0 %v116
    %144 = vmatpush.msra.mxu0 %v115
    %145 = vmatpush.msra.mxu0 %v114
    %146 = vmatpush.msra.mxu0 %v113
    %147 = vmatpush.msra.mxu0 %v112
    %148 = vmatpush.msra.mxu0 %v111
    %149 = vmatpush.msra.mxu0 %v110
    %150 = vmatpush.msra.mxu0 %v109
    %151 = vmatpush.msra.mxu0 %v108
    %152 = vmatpush.msra.mxu0 %v107
    %153 = vmatpush.msra.mxu0 %v106
    %154 = vmatpush.msra.mxu0 %v105
    %155 = vmatpush.msra.mxu0 %v104
    %156 = vmatmul.f32.gmra.mxu0 %v102
    %v157 = vpop.f32.mrf.mxu0
    %v158 = vadd.f32 %v138, %v157
    %159 = vdwg.mxu0
    %160 = vmatpush.msra.mxu0 %v135
    %161 = vmatpush.msra.mxu0 %v134
    %162 = vmatpush.msra.mxu0 %v133
    %163 = vmatpush.msra.mxu0 %v132
    %164 = vmatpush.msra.mxu0 %v131
    %165 = vmatpush.msra.mxu0 %v130
    %166 = vmatpush.msra.mxu0 %v129
    %167 = vmatpush.msra.mxu0 %v128
    %168 = vmatpush.msra.mxu0 %v127
    %169 = vmatpush.msra.mxu0 %v126
    %170 = vmatpush.msra.mxu0 %v125
    %171 = vmatpush.msra.mxu0 %v124
    %172 = vmatpush.msra.mxu0 %v123
    %173 = vmatpush.msra.mxu0 %v122
    %174 = vmatpush.msra.mxu0 %v121
    %175 = vmatpush.msra.mxu0 %v120
    %176 = vmatmul.f32.gmra.mxu0 %v103
    %v177 = vpop.f32.mrf.mxu0
    %v178 = vadd.f32 %v158, %v177
    %179 = vdwg.mxu0
    %v180 = vmax.f32 %v178, 0.0
    %v181 = vld [vmem:[%s5] sm:$0xff]
    %v182 = vld [vmem:[%s5 + $0x8] sm:$0xff]
    %v183 = vld [vmem:[%s5 + $0x10] sm:$0xff]
    %v184 = vld [vmem:[%s5 + $0x18] sm:$0xff]
    %v185 = vld [vmem:[%s5 + $0x20] sm:$0xff]
    %v186 = vld [vmem:[%s5 + $0x28] sm:$0xff]
    %v187 = vld [vmem:[%s5 + $0x30] sm:$0xff]
    %v188 = vld [vmem:[%s5 + $0x38] sm:$0xff]
    %v189 = vld [vmem:[%s5 + $0x40] sm:$0xff]
    %v190 = vld [vmem:[%s5 + $0x48] sm:$0xff]
    %v191 = vld [vmem:[%s5 + $0x50] sm:$0xff]
    %v192 = vld [vmem:[%s5 + $0x58] sm:$0xff]
    %v193 = vld [vmem:[%s5 + $0x60] sm:$0xff]
    %v194 = vld [vmem:[%s5 + $0x68] sm:$0xff]
    %v195 = vld [vmem:[%s5 + $0x70] sm:$0xff]
    %v196 = vld [vmem:[%s5 + $0x78] sm:$0xff]
    %v197 = vld [vmem:[%s6] sm:$0x1]
    %v199 = vperm.slane %v197, 0
    %201 = vmatpush.msra.mxu0 %v196
    %202 = vmatpush.msra.mxu0 %v195
    %203 = vmatpush.msra.mxu0 %v194
    %204 = vmatpush.msra.mxu0 %v193
    %205 = vmatpush.msra.mxu0 %v192
    %206 = vmatpush.msra.mxu0 %v191
    %207 = vmatpush.msra.mxu0 %v190
    %208 = vmatpush.msra.mxu0 %v189
    %209 = vmatpush.msra.mxu0 %v188
    %210 = vmatpush.msra.mxu0 %v187
    %211 = vmatpush.msra.mxu0 %v186
    %212 = vmatpush.msra.mxu0 %v185
    %213 = vmatpush.msra.mxu0 %v184
    %214 = vmatpush.msra.mxu0 %v183
    %215 = vmatpush.msra.mxu0 %v182
    %216 = vmatpush.msra.mxu0 %v181
    %217 = vmatmul.f32.gmra.mxu0 %v180
    %v218 = vpop.f32.mrf.mxu0
    %v219 = vadd.f32 %v199, %v218
    %220 = vdwg.mxu0
    %vm221 = vcmask 523264
    %222 = vst.msk [vmem:[#allocation5] sm:$0xff] %vm221, %v219
    // Predicated region
    $region34: #{id_predictor_forward.1} parent=1 // pred_check
      _
    $region35: #{id_predictor_forward.1} parent=1 // pred_check_branch
      %224 = sbr.rel (0) target = $region37
    $region36: #{id_predictor_forward.1} parent=1 // pred_region
      %226 = vsyncadd [#allocation4], 0
      %s228 = sshll.u32 [#allocation5], 4
      %s229 = int_to_ptr.vmem [resolvable:$true] %s228
      %s230 = sshll.u32 %s7, 4
      %s231 = int_to_ptr.hbm [resolvable:$true] %s230
      %233 = dma.vmem_to_hbm [thread:$0]  %s229, 128, %s231, [#allocation4]
    $region37: #{id_predictor_forward.1} parent=1 // pred_fallthru
      _
    // Predicated region
    $region38: #{id_predictor_forward.1} parent=1 // pred_check
      _
    $region39: #{id_predictor_forward.1} parent=1 // pred_check_branch
      %235 = sbr.rel (0) target = $region41
    $region40: #{id_predictor_forward.1} parent=1 // pred_region
      %237 = dma.done [#allocation4], 128
    $region41: #{id_predictor_forward.1} parent=1 // pred_fallthru
      _
    %238 = vsyncpa [#allocation3], 1
    %239 = vsyncpa [#allocation4], 1

</llo_original>
